<compile_context>
chip_gen: v5e
topology: v5e:2x2
jax: 0.10.0
libtpu: 0.0.40
codegen_flags: <defaults>
</compile_context>

<pallas_src>
import math

import jax
import jax.numpy as jnp
from jax import lax
from jax.experimental import pallas as pl
from jax.experimental.pallas import tpu as pltpu


def _round_up(x, m):
    return ((x + m - 1) // m) * m


def _cdiv(a, b):
    return (a + b - 1) // b


# VMEM planning: stay well under v7x's 64 MiB physical / 32 MiB scoped default.
_VMEM_BUDGET = 40 * 1024 * 1024        # target for tile-plan estimate
_VMEM_LIMIT = 48 * 1024 * 1024         # explicit scoped-VMEM ceiling we request
_RESIDENT_W_MAX_BYTES = 8 * 1024 * 1024  # W bigger than this -> tiled fallback


# --------------------------------------------------------------------------
# Kernels
# --------------------------------------------------------------------------
def _matmul_bias_resident_kernel(x_ref, w_ref, b_ref, o_ref):
    """W / bias are VMEM-resident; one dot + bias per M tile."""
    o_ref[...] = (
        jnp.dot(x_ref[...], w_ref[...], preferred_element_type=jnp.float32)
        + b_ref[...]
    ).astype(o_ref.dtype)


def _matmul_bias_tiled_kernel(x_ref, w_ref, b_ref, o_ref, acc_ref):
    """Fallback: (i, j, k) grid, reduction axis last, f32 accumulator."""
    k = pl.program_id(2)

    @pl.when(k == 0)
    def _init():
        acc_ref[...] = jnp.zeros_like(acc_ref)

    acc_ref[...] += jnp.dot(
        x_ref[...], w_ref[...], preferred_element_type=jnp.float32
    )

    @pl.when(k == pl.num_programs(2) - 1)
    def _finalize():
        o_ref[...] = (acc_ref[...] + b_ref[...]).astype(o_ref.dtype)


# --------------------------------------------------------------------------
# Wrappers
# --------------------------------------------------------------------------
def _resident_matmul_bias(x2d, w2d, b2d, out_dtype):
    """x2d (M, Kd) @ w2d (Kd, N) + b2d (1, N); W kept resident in VMEM."""
    M, Kd = x2d.shape
    N = w2d.shape[1]
    in_bytes = jnp.dtype(x2d.dtype).itemsize
    out_bytes = jnp.dtype(out_dtype).itemsize
    w_bytes = Kd * N * in_bytes
    b_bytes = N * 4

    # tm: big tiles amortize the ~0.35us/step pipeline overhead; keep >=2 tiles
    # when possible so a megacore/v7x dual-TC split has work on both cores;
    # shrink until the resident-W + double-buffered x/out plan fits VMEM.
    M8 = _round_up(M, 8)
    if M8 >= 1024:
        tm = 512
    elif M8 >= 16:
        tm = _round_up(_cdiv(M8, 2), 8)
    else:
        tm = M8
    while tm > 8:
        est = (w_bytes + b_bytes) * 2 \
            + 2 * tm * Kd * in_bytes + 2 * tm * N * out_bytes
        if est <= _VMEM_BUDGET:
            break
        tm = _round_up(_cdiv(tm, 2), 8)

    M_p = _round_up(M, tm)
    padded = M_p != M
    if padded:
        x2d = jnp.pad(x2d, ((0, M_p - M), (0, 0)))

    grid = (M_p // tm,)
    out = pl.pallas_call(
        _matmul_bias_resident_kernel,
        out_shape=jax.ShapeDtypeStruct((M_p, N), out_dtype),
        grid_spec=pltpu.PrefetchScalarGridSpec(
            num_scalar_prefetch=0,
            grid=grid,
            in_specs=[
                # Streamed activations: one (tm, Kd) tile per grid step.
                pl.BlockSpec((tm, Kd), lambda i: (i, 0)),
                # Constant block index -> W / bias DMA'd once, stay resident.
                pl.BlockSpec((Kd, N), lambda i: (0, 0)),
                pl.BlockSpec((1, N), lambda i: (0, 0)),
            ],
            out_specs=pl.BlockSpec((tm, N), lambda i: (i, 0)),
        ),
        compiler_params=pltpu.CompilerParams(
            dimension_semantics=("parallel",),
            vmem_limit_bytes=_VMEM_LIMIT,
        ),
    )(x2d, w2d, b2d)
    return out[:M] if padded else out


def _pick_tile(padded_dim, candidates):
    for c in candidates:
        if padded_dim >= c and padded_dim % c == 0:
            return c
    return padded_dim


def _tiled_matmul_bias(x2d, w2d, b2d, out_dtype):
    """Fallback for very large W: classic tiled matmul with reduction axis."""
    M, Kd = x2d.shape
    N = w2d.shape[1]
    dt = x2d.dtype

    Kd_p = _round_up(Kd, 128)
    N_p = _round_up(N, 128)
    tk = _pick_tile(Kd_p, (1024, 512, 256, 128))
    tn = _pick_tile(N_p, (512, 256, 128))
    M8 = _round_up(M, 8)
    tm = 512 if M8 >= 512 else M8
    M_p = _round_up(M8, tm)

    x_p = jnp.zeros((M_p, Kd_p), dt).at[:M, :Kd].set(x2d)
    w_p = jnp.zeros((Kd_p, N_p), dt).at[:Kd, :N].set(w2d)
    b_p = jnp.zeros((1, N_p), jnp.float32).at[:, :N].set(b2d)

    grid = (M_p // tm, N_p // tn, Kd_p // tk)
    out_p = pl.pallas_call(
        _matmul_bias_tiled_kernel,
        out_shape=jax.ShapeDtypeStruct((M_p, N_p), out_dtype),
        grid_spec=pltpu.PrefetchScalarGridSpec(
            num_scalar_prefetch=0,
            grid=grid,
            in_specs=[
                pl.BlockSpec((tm, tk), lambda i, j, k: (i, k)),
                pl.BlockSpec((tk, tn), lambda i, j, k: (k, j)),
                pl.BlockSpec((1, tn), lambda i, j, k: (0, j)),
            ],
            out_specs=pl.BlockSpec((tm, tn), lambda i, j, k: (i, j)),
            scratch_shapes=[pltpu.VMEM((tm, tn), jnp.float32)],
        ),
        compiler_params=pltpu.CompilerParams(
            dimension_semantics=("parallel", "parallel", "arbitrary"),
            vmem_limit_bytes=_VMEM_LIMIT,
        ),
    )(x_p, w_p, b_p)
    return out_p[:M, :N]


def _pallas_matmul_bias(patches, w2d, bias, *, out_dtype):
    """patches (M, Kd) @ w2d (Kd, N) + bias (N,) -> (M, N)."""
    N = w2d.shape[1]
    b2d = bias.reshape(1, N).astype(jnp.float32)
    w_bytes = w2d.shape[0] * N * jnp.dtype(w2d.dtype).itemsize
    if w_bytes <= _RESIDENT_W_MAX_BYTES:
        return _resident_matmul_bias(patches, w2d, b2d, out_dtype)
    return _tiled_matmul_bias(patches, w2d, b2d, out_dtype)


def conv1d_forward(x, weight, bias=None, *, stride=1, padding=0,
                   compute_dtype=jnp.bfloat16):
    """Equivalent of Conv1D.forward.

    x:      (B, L, Cin)        -- module input (before its internal transpose)
    weight: (Cout, Cin, K)     -- nn.Conv1d weight layout
    bias:   (Cout,) or None
    returns (B, Lout, Cout)

    Set compute_dtype=jnp.float32 for bit-closer parity with torch f32 Conv1d
    (bf16 is the default for native-MXU throughput; ~1e-2 relative error).
    """
    B, L, Cin = x.shape
    Cout, _, K = weight.shape
    if bias is None:
        bias = jnp.zeros((Cout,), jnp.float32)

    # Single wrapper pass over activations: cast fused into patch construction.
    x_c = x.astype(compute_dtype)

    if K == 1 and padding == 0:
        # Pointwise conv: per-position linear layer. No pad / im2col.
        x_g = x_c[:, ::stride, :] if stride > 1 else x_c
        Lout = x_g.shape[1]
        patches = x_g.reshape(B * Lout, Cin)
        w2d = weight[:, :, 0].T.astype(compute_dtype)        # (Cin, Cout)
    else:
        # General case: K contiguous strided slices (no XLA gather).
        x_pd = jnp.pad(x_c, ((0, 0), (padding, padding), (0, 0)))
        Lout = (L + 2 * padding - K) // stride + 1
        taps = [
            lax.slice(x_pd, (0, k, 0),
                      (B, k + (Lout - 1) * stride + 1, Cin),
                      (1, stride, 1))
            for k in range(K)
        ]
        patches = jnp.stack(taps, axis=2).reshape(B * Lout, K * Cin)
        # Flattened (k, c) order matches the (2,1,0)-transposed weight.
        w2d = jnp.transpose(weight, (2, 1, 0)).reshape(K * Cin, Cout)
        w2d = w2d.astype(compute_dtype)

    out = _pallas_matmul_bias(patches, w2d, bias, out_dtype=x.dtype)
    return out.reshape(B, Lout, Cout)


if __name__ == "__main__":
    key = jax.random.PRNGKey(0)

    def _reference(x, weight, bias, stride, padding):
        # Independent f32 reference matching torch nn.Conv1d exactly.
        y = lax.conv_general_dilated(
            jnp.transpose(x, (0, 2, 1)), weight,
            window_strides=(stride,), padding=[(padding, padding)],
            dimension_numbers=("NCH", "OIH", "NCH"))
        y = y + bias[None, :, None]
        return jnp.transpose(y, (0, 2, 1))

    # --- Case 1: module defaults (kernel_size=1, stride=1, padding=0) -------
    B, L, Cin, Cout, K = 2, 16, 32, 32, 1
    k1, k2, k3, key = jax.random.split(key, 4)
    x = jax.random.normal(k1, (B, L, Cin), jnp.float32)
    bound = 1.0 / math.sqrt(Cin * K)
    w = jax.random.uniform(k2, (Cout, Cin, K), jnp.float32, -bound, bound)
    b = jax.random.uniform(k3, (Cout,), jnp.float32, -bound, bound)

    out = jax.block_until_ready(conv1d_forward(x, w, b, stride=1, padding=0))
    ref = _reference(x, w, b, 1, 0)
    assert out.shape == ref.shape
    # bf16 MXU inputs with f32 accumulation -> loose-but-tight-enough tolerance.
    assert jnp.allclose(out, ref, atol=5e-2, rtol=5e-2), \
        float(jnp.max(jnp.abs(out - ref)))

    # --- Case 2: general path (kernel_size=3, stride=2, padding=1) ----------
    B, L, Cin, Cout, K, stride, padding = 2, 16, 32, 48, 3, 2, 1
    k1, k2, k3, key = jax.random.split(key, 4)
    x = jax.random.normal(k1, (B, L, Cin), jnp.float32)
    bound = 1.0 / math.sqrt(Cin * K)
    w = jax.random.uniform(k2, (Cout, Cin, K), jnp.float32, -bound, bound)
    b = jax.random.uniform(k3, (Cout,), jnp.float32, -bound, bound)

    out = jax.block_until_ready(
        conv1d_forward(x, w, b, stride=stride, padding=padding))
    ref = _reference(x, w, b, stride, padding)
    assert out.shape == ref.shape
    assert jnp.allclose(out, ref, atol=5e-2, rtol=5e-2), \
        float(jnp.max(jnp.abs(out - ref)))

    print("KERNEL_OK")
</pallas_src>

<mosaic_0001>
module attributes {stable_mosaic.version = 11 : i64} {
  func.func @_matmul_bias_resident_kernel(%arg0: i32, %arg1: memref<16x32xbf16, #tpu.memory_space<vmem>>, %arg2: memref<32x32xbf16, #tpu.memory_space<vmem>>, %arg3: memref<1x32xf32, #tpu.memory_space<vmem>>, %arg4: memref<16x32xf32, #tpu.memory_space<vmem>>) attributes {dimension_semantics = [#tpu.dimension_semantics<parallel>], iteration_bounds = array<i64: 2>, scalar_prefetch = 0 : i64, scratch_operands = 0 : i64, tpu.core_type = #tpu.core_type<tc>, window_params = [{transform_indices = @transform_0, window_bounds = array<i64: 16, 32>}, {pipeline_mode = #tpu.pipeline_mode<synchronous>, transform_indices = @transform_1, window_bounds = array<i64: 32, 32>}, {pipeline_mode = #tpu.pipeline_mode<synchronous>, transform_indices = @transform_2, window_bounds = array<i64: 1, 32>}, {transform_indices = @transform_3, window_bounds = array<i64: 16, 32>}]} {
    %c0 = arith.constant 0 : index
    %c0_0 = arith.constant 0 : index
    %0 = vector.load %arg1[%c0, %c0_0] : memref<16x32xbf16, #tpu.memory_space<vmem>>, vector<16x32xbf16>
    %c0_1 = arith.constant 0 : index
    %c0_2 = arith.constant 0 : index
    %1 = vector.load %arg2[%c0_1, %c0_2] : memref<32x32xbf16, #tpu.memory_space<vmem>>, vector<32x32xbf16>
    %cst = arith.constant dense<0.000000e+00> : vector<16x32xf32>
    %2 = tpu.matmul %0, %1, %cst {dimension_numbers = #tpu.dot_dimension_numbers<[1], [0], [0], [1], [0, 0, 1, 1], [], []>} : vector<16x32xbf16>, vector<32x32xbf16>, vector<16x32xf32> -> vector<16x32xf32>
    %c0_3 = arith.constant 0 : index
    %c0_4 = arith.constant 0 : index
    %3 = vector.load %arg3[%c0_3, %c0_4] : memref<1x32xf32, #tpu.memory_space<vmem>>, vector<1x32xf32>
    %4 = vector.broadcast %3 : vector<1x32xf32> to vector<16x32xf32>
    %5 = arith.addf %2, %4 : vector<16x32xf32>
    %c0_5 = arith.constant 0 : index
    %c0_6 = arith.constant 0 : index
    %6 = vector.load %arg4[%c0_5, %c0_6] : memref<16x32xf32, #tpu.memory_space<vmem>>, vector<16x32xf32>
    tpu.vector_store %arg4[%c0_5, %c0_6], %5 {strides = array<i32>} : memref<16x32xf32, #tpu.memory_space<vmem>>, vector<16x32xf32>,
    return
  }
  func.func @transform_0(%arg0: i32) -> (i32, i32) {
    %c0_i32 = arith.constant 0 : i32
    %c0_i32_0 = arith.constant 0 : i32
    return %arg0, %c0_i32 : i32, i32
  }
  func.func @transform_1(%arg0: i32) -> (i32, i32) {
    %c0_i32 = arith.constant 0 : i32
    %c0_i32_0 = arith.constant 0 : i32
    %c0_i32_1 = arith.constant 0 : i32
    return %c0_i32, %c0_i32_0 : i32, i32
  }
  func.func @transform_2(%arg0: i32) -> (i32, i32) {
    %c0_i32 = arith.constant 0 : i32
    %c0_i32_0 = arith.constant 0 : i32
    %c0_i32_1 = arith.constant 0 : i32
    return %c0_i32, %c0_i32_0 : i32, i32
  }
  func.func @transform_3(%arg0: i32) -> (i32, i32) {
    %c0_i32 = arith.constant 0 : i32
    %c0_i32_0 = arith.constant 0 : i32
    return %arg0, %c0_i32 : i32, i32
  }
}

</mosaic_0001>

<llo_original>
// kernel: tpu_custom_call.1
$region0: #{tpu_custom_call.1}
  #allocation0 [shape = 'u32[]', space=smem, size = 0x4, offset = 0x4, fixed_abs, tag = 'smem constant byte address 0x4 - core index']
  #allocation1 [shape = 'u32[72,128]{1,0:T(1,128)}', space=vmem, size = 0x9000, scoped, tag = 'internal scratch']
  %s0 = inlined_call_operand.hbm [shape: bf16[32,32], index: 0, kind: input, shape index: {}]
  %s1 = inlined_call_operand.hbm [shape: bf16[32,32], index: 1, kind: input, shape index: {}]
  %s2 = inlined_call_operand.vmem [shape: f32[1,32], index: 2, kind: input, shape index: {}]
  %s3 = inlined_call_operand.hbm [shape: f32[32,32], index: 3, kind: output, shape index: {}]
  %s4 = sld [smem:[#allocation0]]
  $region53: #{tpu_custom_call.1} parent=0
    _
  %s6 = ssub.s32 1, %s4
  %s7 = scalar_select 0, %s6, %s4
  $region1: #{tpu_custom_call.1} parent=0
    #allocation2 [shape = 'u8[8192]{0}', space=vmem, size = 0x2000, scoped, tag = 'input window, operand 0']
    #allocation3 [shape = 's32[2]{0}', space=sflag, size = 0x8, scoped, tag = 'scoped memory for tpu_custom_call.1']
    #allocation4 [shape = 's32[2]{0}', space=sflag, size = 0x8, scoped, tag = 'scoped memory for tpu_custom_call.1']
    #allocation5 [shape = 'u8[8192]{0}', space=vmem, size = 0x2000, scoped, tag = 'input window, operand 1, single buffered']
    #allocation6 [shape = 's32[1]{0}', space=sflag, size = 0x4, scoped, tag = 'scoped memory for tpu_custom_call.1']
    #allocation7 [shape = 'u8[16384]{0}', space=vmem, size = 0x4000, scoped, tag = 'output window, operand 0']
    %8 = vsyncpa [#allocation3], 0
    %s9 = scalar_lea.sflag [#allocation3], 1
    %10 = vsyncpa %s9, 0
    %11 = vsyncpa [#allocation6], 0
    %12 = vsyncpa [#allocation4], 0
    %s13 = scalar_lea.sflag [#allocation4], 1
    %14 = vsyncpa %s13, 0
    loop: start=0, step=1, limit=4
    $region2: #{tpu_custom_call.1} parent=1 // loop_pre_header
      _
    $region3: #{tpu_custom_call.1} parent=1 // loop_header
      %s16 = sphi 0, %s20
      %p17 = scmp.ge.s32.totalorder %s16, 4
      %s26 = sphi 0, %s28
      %s29 = sphi 0, %s26
      %s30 = sphi 0, %s29
      %s46 = sphi 0, %s30
      %s50 = sphi 0, %s50
      %s52 = sphi 0, %s50
      %s53 = sphi 0, %s52
      %s67 = sphi 0, %s53
      %s71 = sphi 0, %s71
      %s73 = sphi 0, %s71
      %s74 = sphi 0, %s73
      %s88 = sphi 0, %s74
      %s94 = sphi 0, %s96
      %s97 = sphi 0, %s94
      %s98 = sphi 0, %s97
      %s114 = sphi 0, %s98
    $region4: #{tpu_custom_call.1} parent=1 // loop_header_branch
      %19 = sbr.rel (%p17) target = $region8
    $region5: #{tpu_custom_call.1} parent=1 // loop_body
      %s21 = ssub.s32 %s16, 1
      %s22 = ssub.s32 %s16, 2
      %s23 = sadd.s32 %s16, 1
      %s24 = ssub.s32 %s16, %s23
      %p25 = scmp.eq.s32.totalorder %s24, 0
      %s27 = sadd.s32 %s26, 1
      %s28 = scalar_select %p25, %s26, %s27
      %p31 = pneg %p25
      %p32 = scmp.eq.s32.totalorder %s16, 1
      %p33 = por %p31, %p32
      %p34 = scmp.ne.s32.totalorder %s26, %s29
      %p35 = scmp.eq.s32.totalorder %s16, 0
      %p36 = por %p34, %p35
      %p37 = scmp.ne.s32.totalorder %s26, %s29
      %p38 = scmp.eq.s32.totalorder %s21, 1
      %p39 = por %p37, %p38
      %p40 = scmp.ne.s32.totalorder %s29, %s30
      %p41 = scmp.eq.s32.totalorder %s21, 0
      %p42 = por %p40, %p41
      %p43 = scmp.ne.s32.totalorder %s29, %s30
      %p44 = scmp.eq.s32.totalorder %s22, 1
      %p45 = por %p43, %p44
      %p47 = scmp.ne.s32.totalorder %s30, %s46
      %p48 = scmp.eq.s32.totalorder %s22, 0
      %p49 = por %p47, %p48
      %s51 = sadd.s32 %s50, 1
      %p54 = scmp.eq.s32.totalorder %s16, 1
      %p55 = scmp.ne.s32.totalorder %s50, %s52
      %p56 = scmp.eq.s32.totalorder %s16, 0
      %p57 = por %p55, %p56
      %p58 = scmp.ne.s32.totalorder %s50, %s52
      %p59 = scmp.eq.s32.totalorder %s21, 1
      %p60 = por %p58, %p59
      %p61 = scmp.ne.s32.totalorder %s52, %s53
      %p62 = scmp.eq.s32.totalorder %s21, 0
      %p63 = por %p61, %p62
      %p64 = scmp.ne.s32.totalorder %s52, %s53
      %p65 = scmp.eq.s32.totalorder %s22, 1
      %p66 = por %p64, %p65
      %p68 = scmp.ne.s32.totalorder %s53, %s67
      %p69 = scmp.eq.s32.totalorder %s22, 0
      %p70 = por %p68, %p69
      %s72 = sadd.s32 %s71, 1
      %p75 = scmp.eq.s32.totalorder %s16, 1
      %p76 = scmp.ne.s32.totalorder %s71, %s73
      %p77 = scmp.eq.s32.totalorder %s16, 0
      %p78 = por %p76, %p77
      %p79 = scmp.ne.s32.totalorder %s71, %s73
      %p80 = scmp.eq.s32.totalorder %s21, 1
      %p81 = por %p79, %p80
      %p82 = scmp.ne.s32.totalorder %s73, %s74
      %p83 = scmp.eq.s32.totalorder %s21, 0
      %p84 = por %p82, %p83
      %p85 = scmp.ne.s32.totalorder %s73, %s74
      %p86 = scmp.eq.s32.totalorder %s22, 1
      %p87 = por %p85, %p86
      %p89 = scmp.ne.s32.totalorder %s74, %s88
      %p90 = scmp.eq.s32.totalorder %s22, 0
      %p91 = por %p89, %p90
      %s92 = ssub.s32 %s16, %s23
      %p93 = scmp.eq.s32.totalorder %s92, 0
      %s95 = sadd.s32 %s94, 1
      %s96 = scalar_select %p93, %s94, %s95
      %p99 = pneg %p93
      %p100 = scmp.eq.s32.totalorder %s16, 1
      %p101 = por %p99, %p100
      %p102 = scmp.ne.s32.totalorder %s94, %s97
      %p103 = scmp.eq.s32.totalorder %s16, 0
      %p104 = por %p102, %p103
      %p105 = scmp.ne.s32.totalorder %s94, %s97
      %p106 = scmp.eq.s32.totalorder %s21, 1
      %p107 = por %p105, %p106
      %p108 = scmp.ne.s32.totalorder %s97, %s98
      %p109 = scmp.eq.s32.totalorder %s21, 0
      %p110 = por %p108, %p109
      %p111 = scmp.ne.s32.totalorder %s97, %s98
      %p112 = scmp.eq.s32.totalorder %s22, 1
      %p113 = por %p111, %p112
      %p115 = scmp.ne.s32.totalorder %s98, %s114
      %p116 = scmp.eq.s32.totalorder %s22, 0
      %p117 = por %p115, %p116
      %p118 = scmp.le.s32.totalorder 1, %s16
      %p119 = scmp.lt.s32.totalorder %s16, 3
      %p120 = pnand %p118, %p119
      %p121 = pneg %p120
      // Predicated region
      $region9: #{tpu_custom_call.1} parent=5 // pred_check
        _
      $region10: #{tpu_custom_call.1} parent=5 // pred_check_branch
        %123 = sbr.rel (%p120) target = $region12
      $region11: #{tpu_custom_call.1} parent=5 // pred_region
        %s124 = ssub.s32 %s16, 1
        // Predicated region
        $region13: #{tpu_custom_call.1} parent=11 // pred_check
          %p125 = pneg %p63
        $region14: #{tpu_custom_call.1} parent=11 // pred_check_branch
          %127 = sbr.rel (%p125) target = $region16
        $region15: #{tpu_custom_call.1} parent=11 // pred_region
          %129 = vsyncadd [#allocation6], 0
          %s130 = sshll.u32 %s1, 4
          %s131 = int_to_ptr.hbm [resolvable:$true] %s130
          %s132 = sshll.u32 [#allocation5], 4
          %s133 = int_to_ptr.vmem [resolvable:$true] %s132
          %138 = dma.hbm_to_vmem [thread:$0]  %s131, 256, %s133, [#allocation6], 64, 64, 4
        $region16: #{tpu_custom_call.1} parent=11 // pred_fallthru
          _
        // Predicated region
        $region17: #{tpu_custom_call.1} parent=11 // pred_check
          %p139 = pneg %p84
        $region18: #{tpu_custom_call.1} parent=11 // pred_check_branch
          %141 = sbr.rel (%p139) target = $region20
        $region19: #{tpu_custom_call.1} parent=11 // pred_region
          _
        $region20: #{tpu_custom_call.1} parent=11 // pred_fallthru
          _
      $region12: #{tpu_custom_call.1} parent=5 // pred_fallthru
        _
      %p142 = scmp.lt.s32.totalorder %s16, 2
      // Predicated region
      $region21: #{tpu_custom_call.1} parent=5 // pred_check
        %p143 = pneg %p142
      $region22: #{tpu_custom_call.1} parent=5 // pred_check_branch
        %145 = sbr.rel (%p143) target = $region24
      $region23: #{tpu_custom_call.1} parent=5 // pred_region
        // Predicated region
        $region25: #{tpu_custom_call.1} parent=23 // pred_check
          %p146 = pneg %p36
        $region26: #{tpu_custom_call.1} parent=23 // pred_check_branch
          %148 = sbr.rel (%p146) target = $region28
        $region27: #{tpu_custom_call.1} parent=23 // pred_region
          %s149 = sand.u32 %s26, 1
          %s150 = scalar_lea.sflag [#allocation3], %s149
          %s151 = sand.u32 %s26, 1
          %s152 = smul.addr %s151, 8
          %s153 = scalar_lea.vmem [#allocation2], %s152
          %s154 = smul.u32 2, %s16
          %156 = vsyncadd %s150, 0
          %s157 = smul.addr %s154, 4
          %s158 = scalar_lea.hbm %s0, %s157
          %s159 = sshll.u32 %s158, 4
          %s160 = int_to_ptr.hbm [resolvable:$true] %s159
          %s161 = sshll.u32 %s153, 4
          %s162 = int_to_ptr.vmem [resolvable:$true] %s161
          %167 = dma.hbm_to_vmem [thread:$0]  %s160, 128, %s162, %s150, 64, 64, 4
        $region28: #{tpu_custom_call.1} parent=23 // pred_fallthru
          _
      $region24: #{tpu_custom_call.1} parent=5 // pred_fallthru
        _
      %p168 = scmp.le.s32.totalorder 1, %s16
      %p169 = scmp.lt.s32.totalorder %s16, 3
      %p170 = pnand %p168, %p169
      %p171 = pneg %p170
      // Predicated region
      $region29: #{tpu_custom_call.1} parent=5 // pred_check
        _
      $region30: #{tpu_custom_call.1} parent=5 // pred_check_branch
        %173 = sbr.rel (%p170) target = $region32
      $region31: #{tpu_custom_call.1} parent=5 // pred_region
        %s174 = ssub.s32 %s16, 1
        %s175 = sand.u32 %s29, 1
        %s176 = scalar_lea.sflag [#allocation3], %s175
        %s177 = sand.u32 %s29, 1
        %s178 = smul.addr %s177, 8
        %s179 = scalar_lea.vmem [#allocation2], %s178
        // Predicated region
        $region33: #{tpu_custom_call.1} parent=31 // pred_check
          %p180 = pneg %p42
        $region34: #{tpu_custom_call.1} parent=31 // pred_check_branch
          %182 = sbr.rel (%p180) target = $region36
        $region35: #{tpu_custom_call.1} parent=31 // pred_region
          %184 = dma.done %s176, 128
        $region36: #{tpu_custom_call.1} parent=31 // pred_fallthru
          _
        // Predicated region
        $region37: #{tpu_custom_call.1} parent=31 // pred_check
          %p185 = pneg %p63
        $region38: #{tpu_custom_call.1} parent=31 // pred_check_branch
          %187 = sbr.rel (%p185) target = $region40
        $region39: #{tpu_custom_call.1} parent=31 // pred_region
          %189 = dma.done [#allocation6], 256
        $region40: #{tpu_custom_call.1} parent=31 // pred_fallthru
          _
        %s190 = sand.u32 %s29, 1
        %s191 = scalar_lea.sflag [#allocation3], %s190
        %s192 = sand.u32 %s29, 1
        %s193 = smul.addr %s192, 8
        %s194 = scalar_lea.vmem [#allocation2], %s193
        %p195 = pneg %p42
        %p196 = pneg %p39
        %p197 = pneg %p63
        %p198 = pneg %p60
        %p199 = pneg %p84
        %p200 = pneg %p81
        %p201 = pneg %p110
        %p202 = pneg %p107
        %s203 = sand.u32 %s97, 1
        %s204 = scalar_lea.sflag [#allocation4], %s203
        %s205 = sand.u32 %s97, 1
        %s206 = smul.addr %s205, 16
        %s207 = scalar_lea.vmem [#allocation7], %s206
        %s208 = smul.u32 2, %s21
        %s209 = smul.u32 2, %s21
        %v211 = vld [vmem:[%s179] sm:$0xf]
        %v212 = vld [vmem:[%s179 + $0x4] sm:$0xf]
        %v213 = vld [vmem:[#allocation5] sm:$0xf]
        %v214 = vld [vmem:[#allocation5 + $0x4] sm:$0xf]
        %v215 = vld [vmem:[#allocation5 + $0x8] sm:$0xf]
        %v216 = vld [vmem:[#allocation5 + $0xc] sm:$0xf]
        %v217 = vld [vmem:[%s2] sm:$0x1]
        %v219 = vperm.slane %v217, 0
        %v223 = vunpack.c.l.b16 %v211
        %v224 = vunpack.c.l.b16 %v212
        %v225 = vpack.c.b16 %v224, %v223
        %v230 = vunpack.c.l.b16 %v213
        %v231 = vunpack.c.l.b16 %v214
        %v232 = vunpack.c.l.b16 %v215
        %v233 = vunpack.c.l.b16 %v216
        %v234 = vpack.c.b16 %v231, %v230
        %v235 = vpack.c.b16 %v233, %v232
        %vm238 = vcmask 261120
        %v240 = vsel %vm238, %v225, 0
        %242 = vmatpush.bf16.msra.mxu0 0
        %243 = vmatpush.bf16.msra.mxu0 0
        %244 = vmatpush.bf16.msra.mxu0 0
        %245 = vmatpush.bf16.msra.mxu0 0
        %246 = vmatpush.bf16.msra.mxu0 0
        %247 = vmatpush.bf16.msra.mxu0 0
        %248 = vmatpush.bf16.msra.mxu0 %v235
        %249 = vmatpush.bf16.msra.mxu0 %v234
        %250 = vmatmul.bf16.gmra.mxu0 %v240
        %v251 = vpop.f32.mrf.mxu0
        %v252 = vadd.f32 %v219, %v251
        %v253 = vpop.f32.mrf.mxu0
        %v254 = vadd.f32 %v219, %v253
        %255 = vdwg.mxu0
        %256 = vst.msk [vmem:[%s207] sm:$0xff] %vm238, %v252
        %257 = vst.msk [vmem:[%s207 + $0x8] sm:$0xff] %vm238, %v254
        %s258 = sand.u32 %s97, 1
        %s259 = scalar_lea.sflag [#allocation4], %s258
        %s260 = sand.u32 %s97, 1
        %s261 = smul.addr %s260, 16
        %s262 = scalar_lea.vmem [#allocation7], %s261
        // Predicated region
        $region41: #{tpu_custom_call.1} parent=31 // pred_check
          %p263 = pneg %p107
        $region42: #{tpu_custom_call.1} parent=31 // pred_check_branch
          %265 = sbr.rel (%p263) target = $region44
        $region43: #{tpu_custom_call.1} parent=31 // pred_region
          %s266 = smul.u32 2, %s21
          %268 = vsyncadd %s259, 0
          %s269 = smul.addr %s266, 8
          %s270 = scalar_lea.hbm %s3, %s269
          %s271 = sshll.u32 %s262, 4
          %s272 = int_to_ptr.vmem [resolvable:$true] %s271
          %s273 = sshll.u32 %s270, 4
          %s274 = int_to_ptr.hbm [resolvable:$true] %s273
          %279 = dma.vmem_to_hbm [thread:$0]  %s272, 256, %s274, %s259, 128, 128, 8
        $region44: #{tpu_custom_call.1} parent=31 // pred_fallthru
          _
      $region32: #{tpu_custom_call.1} parent=5 // pred_fallthru
        _
      %p280 = scmp.le.s32.totalorder 2, %s16
      // Predicated region
      $region45: #{tpu_custom_call.1} parent=5 // pred_check
        %p281 = pneg %p280
      $region46: #{tpu_custom_call.1} parent=5 // pred_check_branch
        %283 = sbr.rel (%p281) target = $region48
      $region47: #{tpu_custom_call.1} parent=5 // pred_region
        %s284 = ssub.s32 %s16, 2
        // Predicated region
        $region49: #{tpu_custom_call.1} parent=47 // pred_check
          %p285 = pneg %p113
        $region50: #{tpu_custom_call.1} parent=47 // pred_check_branch
          %287 = sbr.rel (%p285) target = $region52
        $region51: #{tpu_custom_call.1} parent=47 // pred_region
          %s288 = sand.u32 %s98, 1
          %s289 = scalar_lea.sflag [#allocation4], %s288
          %s290 = sand.u32 %s98, 1
          %s291 = smul.addr %s290, 16
          %s292 = scalar_lea.vmem [#allocation7], %s291
          %294 = dma.done %s289, 256
        $region52: #{tpu_custom_call.1} parent=47 // pred_fallthru
          _
      $region48: #{tpu_custom_call.1} parent=5 // pred_fallthru
        _
    $region6: #{tpu_custom_call.1} parent=1 // loop_footer
      %s20 = sadd.s32 1, %s16
    $region7: #{tpu_custom_call.1} parent=1 // loop_footer_branch
      %15 = sbr.rel target = $region3
    $region8: #{tpu_custom_call.1} parent=1 // loop_exit
      _
    %295 = vsyncpa [#allocation3], 1
    %s296 = scalar_lea.sflag [#allocation3], 1
    %297 = vsyncpa %s296, 1
    %298 = vsyncpa [#allocation6], 1
    %299 = vsyncpa [#allocation4], 1
    %s300 = scalar_lea.sflag [#allocation4], 1
    %301 = vsyncpa %s300, 1

</llo_original>
